<compile_context>
chip_gen: v5e
topology: v5e:2x2
jax: 0.10.0
libtpu: 0.0.40
codegen_flags: <defaults>
</compile_context>

<pallas_src>
import functools

import jax
import jax.numpy as jnp
from jax.experimental import pallas as pl
from jax.experimental.pallas import tpu as pltpu


def _round_up(n, m):
    return ((n + m - 1) // m) * m


def _mlp_kernel(mid_layers, eps, compute_dtype,
                x_ref, wfc_ref, bfc_ref, wmid_ref, bmid_ref,
                wout_ref, bout_ref, gamma_ref, beta_ref, o_ref):
    # ---- input layer: relu(x @ Wfc + bfc) ----  (compute_dtype x compute_dtype -> f32)
    h = jnp.dot(x_ref[...], wfc_ref[...], preferred_element_type=jnp.float32)
    h = jnp.maximum(h + bfc_ref[...], 0.0)

    # Loop-invariant [1, P] rows. Kept as single-sublane rows and broadcast at op
    # level inside the loop body — do NOT materialize (B, P) copies (vreg/VMEM
    # pressure that competes with the accumulator at large B).
    bmid = bmid_ref[...]
    gamma = gamma_ref[...]
    beta = beta_ref[...]

    def mid_layer(h_f32):
        # Read the mid weight through the ref inside the dot so Mosaic streams it
        # from VMEM instead of pinning a [pm, pm] value in vregs across the loop.
        z = jnp.dot(h_f32.astype(compute_dtype), wmid_ref[...],
                    preferred_element_type=jnp.float32)
        z = z + bmid
        # BatchNorm1d (training-mode stats), all in f32.
        # Centered two-pass variance: matches PyTorch's biased batch variance and
        # avoids E[z^2]-E[z]^2 catastrophic cancellation.
        mean = jnp.mean(z, axis=0, keepdims=True)
        centered = z - mean
        var = jnp.mean(centered * centered, axis=0, keepdims=True)
        z_hat = centered * jax.lax.rsqrt(var + eps)
        return jnp.maximum(z_hat * gamma + beta, 0.0)

    if mid_layers <= 8:
        # Short fixed trip count: fully unroll at trace time.
        for _ in range(mid_layers):
            h = mid_layer(h)
    else:
        # Weights live in refs (closed over), so the carry is just h.
        # unroll=4 keeps the body visible to the LLO scheduler without blowing up
        # code size (a hidden non-unrolled loop costs ~35% on comparable bodies).
        h = jax.lax.fori_loop(0, mid_layers, lambda _, hh: mid_layer(hh), h,
                              unroll=4)

    # ---- output layer: relu(h @ Wout + bout) ----
    out = jnp.dot(h.astype(compute_dtype), wout_ref[...],
                  preferred_element_type=jnp.float32)
    o_ref[...] = jnp.maximum(out + bout_ref[...], 0.0).astype(o_ref.dtype)


def prepare_params(params, *, weight_dtype=jnp.bfloat16):
    """One-time prep (NOT per forward call): transpose PyTorch [out, in] weights to
    [in, out], zero-pad every feature dim to a multiple of 128 (lane-dense), cast
    weights to weight_dtype. Biases / gamma / beta stay f32 (BN math is f32)."""
    mid_size, in_size = params["w_fc"].shape
    out_size = params["w_out"].shape[0]
    pi, pm, po = (_round_up(s, 128) for s in (in_size, mid_size, out_size))

    def pad_mat(w_t, rows, cols):           # w_t already [in, out]
        return jnp.pad(w_t, ((0, rows - w_t.shape[0]), (0, cols - w_t.shape[1])))

    def pad_row(v, cols, fill=0.0):
        v = v.reshape(1, -1)
        return jnp.pad(v, ((0, 0), (0, cols - v.shape[1])), constant_values=fill)

    return {
        "wfc": pad_mat(params["w_fc"].T, pi, pm).astype(weight_dtype),
        "wmid": pad_mat(params["w_mid"].T, pm, pm).astype(weight_dtype),
        "wout": pad_mat(params["w_out"].T, pm, po).astype(weight_dtype),
        "bfc": pad_row(params["b_fc"], pm).astype(jnp.float32),
        "bmid": pad_row(params["b_mid"], pm).astype(jnp.float32),
        "bout": pad_row(params["b_out"], po).astype(jnp.float32),
        "gamma": pad_row(params["bn_gamma"], pm, fill=1.0).astype(jnp.float32),
        "beta": pad_row(params["bn_beta"], pm).astype(jnp.float32),
        "sizes": (in_size, mid_size, out_size, pi, pm, po),
        "weight_dtype": weight_dtype,
    }


def _vmem_limit_bytes(need_bytes):
    """Generation-aware scoped-VMEM limit: physical capacity minus fixed headroom
    (compiler-internal scratch, semaphores, output staging). ~56 MiB usable on v7x
    (64 MiB physical), ~112 MiB on v5e/v6e (128 MiB physical)."""
    try:
        info = pltpu.get_tpu_info()
        phys = int(getattr(info, "vmem_capacity_bytes", 64 << 20))
    except Exception:
        phys = 64 << 20                      # conservative fallback: v7x per-TC VMEM
    headroom = max(8 << 20, phys // 8)
    cap = phys - headroom
    return int(min(max(need_bytes, 32 << 20), cap))


def mlp_forward(x, prepped, *, mid_layers, eps=1e-5):
    """x: [B, input_size] float32. prepped: output of prepare_params()."""
    in_size, _, out_size, pi, pm, po = prepped["sizes"]
    wdt = prepped["weight_dtype"]
    B = x.shape[0]

    # Pad features only (NOT batch: BatchNorm stats are over the batch axis).
    x_p = jnp.pad(x, ((0, 0), (0, pi - in_size))).astype(wdt)

    kernel = functools.partial(_mlp_kernel, mid_layers, eps, wdt)
    vmem = pl.BlockSpec(memory_space=pltpu.MemorySpace.VMEM)

    # Resident-buffer estimate. No grid => nothing is double-buffered, so no 2x
    # factor; add elementwise/accumulator scratch headroom on top.
    wbytes = jnp.dtype(wdt).itemsize
    in_bytes = (B * pi + pi * pm + pm * pm + pm * po) * wbytes + (5 * pm + po) * 4
    out_bytes = B * po * 4
    scratch_est = 6 * B * pm * 4             # h/z/centered temporaries (f32)
    vmem_limit = _vmem_limit_bytes(in_bytes + out_bytes + scratch_est)

    out_p = pl.pallas_call(
        kernel,
        out_shape=jax.ShapeDtypeStruct((B, po), jnp.float32),
        in_specs=[vmem] * 9,
        out_specs=vmem,
        compiler_params=pltpu.CompilerParams(vmem_limit_bytes=vmem_limit),
    )(x_p, prepped["wfc"], prepped["bfc"], prepped["wmid"], prepped["bmid"],
      prepped["wout"], prepped["bout"], prepped["gamma"], prepped["beta"])

    return out_p[:, :out_size]


def init_params(key, input_size, mid_size, output_size):
    """Deterministic synthetic init in PyTorch layout (weights are [out, in])."""
    ks = jax.random.split(key, 6)

    def lin(kw, kb, fan_in, fan_out):
        bound = 1.0 / (fan_in ** 0.5)
        w = jax.random.uniform(kw, (fan_out, fan_in), jnp.float32, -bound, bound)
        b = jax.random.uniform(kb, (fan_out,), jnp.float32, -bound, bound)
        return w, b

    w_fc, b_fc = lin(ks[0], ks[1], input_size, mid_size)
    w_mid, b_mid = lin(ks[2], ks[3], mid_size, mid_size)
    w_out, b_out = lin(ks[4], ks[5], mid_size, output_size)
    return {
        "w_fc": w_fc, "b_fc": b_fc,
        "w_mid": w_mid, "b_mid": b_mid,
        "w_out": w_out, "b_out": b_out,
        "bn_gamma": jnp.ones((mid_size,), jnp.float32),
        "bn_beta": jnp.zeros((mid_size,), jnp.float32),
    }


def _reference_forward(x, params, *, mid_layers, eps=1e-5):
    """Plain-JAX f32 reference (faithful to the PyTorch module)."""
    h = jnp.maximum(x @ params["w_fc"].T + params["b_fc"], 0.0)
    for _ in range(mid_layers):
        z = h @ params["w_mid"].T + params["b_mid"]
        mean = jnp.mean(z, axis=0, keepdims=True)
        var = jnp.mean((z - mean) ** 2, axis=0, keepdims=True)
        z = (z - mean) / jnp.sqrt(var + eps)
        h = jnp.maximum(z * params["bn_gamma"] + params["bn_beta"], 0.0)
    return jnp.maximum(h @ params["w_out"].T + params["b_out"], 0.0)


if __name__ == "__main__":
    B = 8
    input_size, mid_size, output_size = 16, 32, 8

    key = jax.random.PRNGKey(0)
    kx, kp = jax.random.split(key)
    x = jax.random.normal(kx, (B, input_size), jnp.float32)
    params = init_params(kp, input_size, mid_size, output_size)

    prep_f32 = prepare_params(params, weight_dtype=jnp.float32)
    prep_bf16 = prepare_params(params, weight_dtype=jnp.bfloat16)

    # --- mid_layers=2: trace-time-unrolled path ---
    mid_layers = 2
    ref = _reference_forward(x, params, mid_layers=mid_layers)

    out_f32 = jax.block_until_ready(mlp_forward(x, prep_f32, mid_layers=mid_layers))
    assert out_f32.shape == (B, output_size)
    assert jnp.allclose(out_f32, ref, atol=1e-3, rtol=1e-3), "f32 mismatch vs reference"

    # bf16-weight path (MXU fast path, f32 accumulation + f32 BN): loose check.
    out_bf16 = jax.block_until_ready(mlp_forward(x, prep_bf16, mid_layers=mid_layers))
    assert out_bf16.shape == (B, output_size)
    assert jnp.allclose(out_bf16, ref, atol=5e-2, rtol=5e-2), "bf16 mismatch vs reference"

    # --- mid_layers=10: exercises the unrolled fori_loop path ---
    deep_layers = 10
    ref_deep = _reference_forward(x, params, mid_layers=deep_layers)
    out_deep = jax.block_until_ready(mlp_forward(x, prep_f32, mid_layers=deep_layers))
    assert out_deep.shape == (B, output_size)
    assert jnp.allclose(out_deep, ref_deep, atol=2e-3, rtol=2e-3), "deep f32 mismatch"

    print("KERNEL_OK")
</pallas_src>

<mosaic_0001>
module attributes {stable_mosaic.version = 11 : i64} {
  func.func @_mlp_kernel(%arg0: memref<8x128xf32, #tpu.memory_space<vmem>>, %arg1: memref<128x128xf32, #tpu.memory_space<vmem>>, %arg2: memref<1x128xf32, #tpu.memory_space<vmem>>, %arg3: memref<128x128xf32, #tpu.memory_space<vmem>>, %arg4: memref<1x128xf32, #tpu.memory_space<vmem>>, %arg5: memref<128x128xf32, #tpu.memory_space<vmem>>, %arg6: memref<1x128xf32, #tpu.memory_space<vmem>>, %arg7: memref<1x128xf32, #tpu.memory_space<vmem>>, %arg8: memref<1x128xf32, #tpu.memory_space<vmem>>, %arg9: memref<8x128xf32, #tpu.memory_space<vmem>>) attributes {dimension_semantics = [], scalar_prefetch = 0 : i64, scratch_operands = 0 : i64, tpu.core_type = #tpu.core_type<tc>} {
    %c0 = arith.constant 0 : index
    %c0_0 = arith.constant 0 : index
    %0 = vector.load %arg0[%c0, %c0_0] : memref<8x128xf32, #tpu.memory_space<vmem>>, vector<8x128xf32>
    %c0_1 = arith.constant 0 : index
    %c0_2 = arith.constant 0 : index
    %1 = vector.load %arg1[%c0_1, %c0_2] : memref<128x128xf32, #tpu.memory_space<vmem>>, vector<128x128xf32>
    %cst = arith.constant dense<0.000000e+00> : vector<8x128xf32>
    %2 = tpu.matmul %0, %1, %cst {dimension_numbers = #tpu.dot_dimension_numbers<[1], [0], [0], [1], [0, 0, 1, 1], [], []>} : vector<8x128xf32>, vector<128x128xf32>, vector<8x128xf32> -> vector<8x128xf32>
    %c0_3 = arith.constant 0 : index
    %c0_4 = arith.constant 0 : index
    %3 = vector.load %arg2[%c0_3, %c0_4] : memref<1x128xf32, #tpu.memory_space<vmem>>, vector<1x128xf32>
    %4 = vector.broadcast %3 : vector<1x128xf32> to vector<8x128xf32>
    %5 = arith.addf %2, %4 : vector<8x128xf32>
    %cst_5 = arith.constant 0.000000e+00 : f32
    %6 = vector.broadcast %cst_5 : f32 to vector<8x128xf32>
    %7 = arith.maximumf %5, %6 : vector<8x128xf32>
    %c0_6 = arith.constant 0 : index
    %c0_7 = arith.constant 0 : index
    %8 = vector.load %arg4[%c0_6, %c0_7] : memref<1x128xf32, #tpu.memory_space<vmem>>, vector<1x128xf32>
    %c0_8 = arith.constant 0 : index
    %c0_9 = arith.constant 0 : index
    %9 = vector.load %arg7[%c0_8, %c0_9] : memref<1x128xf32, #tpu.memory_space<vmem>>, vector<1x128xf32>
    %c0_10 = arith.constant 0 : index
    %c0_11 = arith.constant 0 : index
    %10 = vector.load %arg8[%c0_10, %c0_11] : memref<1x128xf32, #tpu.memory_space<vmem>>, vector<1x128xf32>
    %c0_12 = arith.constant 0 : index
    %c0_13 = arith.constant 0 : index
    %11 = vector.load %arg3[%c0_12, %c0_13] : memref<128x128xf32, #tpu.memory_space<vmem>>, vector<128x128xf32>
    %cst_14 = arith.constant dense<0.000000e+00> : vector<8x128xf32>
    %12 = tpu.matmul %7, %11, %cst_14 {dimension_numbers = #tpu.dot_dimension_numbers<[1], [0], [0], [1], [0, 0, 1, 1], [], []>} : vector<8x128xf32>, vector<128x128xf32>, vector<8x128xf32> -> vector<8x128xf32>
    %13 = vector.broadcast %8 : vector<1x128xf32> to vector<8x128xf32>
    %14 = arith.addf %12, %13 : vector<8x128xf32>
    %cst_15 = arith.constant dense<0.000000e+00> : vector<128xf32>
    %15 = vector.multi_reduction <add>, %14, %cst_15 [0] : vector<8x128xf32> to vector<128xf32>
    %16 = vector.shape_cast %15 : vector<128xf32> to vector<1x128xf32>
    %cst_16 = arith.constant 8.000000e+00 : f32
    %17 = vector.broadcast %cst_16 : f32 to vector<1x128xf32>
    %18 = arith.divf %16, %17 : vector<1x128xf32>
    %19 = vector.broadcast %18 : vector<1x128xf32> to vector<8x128xf32>
    %20 = arith.subf %14, %19 : vector<8x128xf32>
    %21 = arith.mulf %20, %20 : vector<8x128xf32>
    %cst_17 = arith.constant dense<0.000000e+00> : vector<128xf32>
    %22 = vector.multi_reduction <add>, %21, %cst_17 [0] : vector<8x128xf32> to vector<128xf32>
    %23 = vector.shape_cast %22 : vector<128xf32> to vector<1x128xf32>
    %cst_18 = arith.constant 8.000000e+00 : f32
    %24 = vector.broadcast %cst_18 : f32 to vector<1x128xf32>
    %25 = arith.divf %23, %24 : vector<1x128xf32>
    %cst_19 = arith.constant 9.99999974E-6 : f32
    %26 = vector.broadcast %cst_19 : f32 to vector<1x128xf32>
    %27 = arith.addf %25, %26 : vector<1x128xf32>
    %28 = math.rsqrt %27 : vector<1x128xf32>
    %29 = vector.broadcast %28 : vector<1x128xf32> to vector<8x128xf32>
    %30 = arith.mulf %20, %29 : vector<8x128xf32>
    %31 = vector.broadcast %9 : vector<1x128xf32> to vector<8x128xf32>
    %32 = arith.mulf %30, %31 : vector<8x128xf32>
    %33 = vector.broadcast %10 : vector<1x128xf32> to vector<8x128xf32>
    %34 = arith.addf %32, %33 : vector<8x128xf32>
    %cst_20 = arith.constant 0.000000e+00 : f32
    %35 = vector.broadcast %cst_20 : f32 to vector<8x128xf32>
    %36 = arith.maximumf %34, %35 : vector<8x128xf32>
    %c0_21 = arith.constant 0 : index
    %c0_22 = arith.constant 0 : index
    %37 = vector.load %arg3[%c0_21, %c0_22] : memref<128x128xf32, #tpu.memory_space<vmem>>, vector<128x128xf32>
    %cst_23 = arith.constant dense<0.000000e+00> : vector<8x128xf32>
    %38 = tpu.matmul %36, %37, %cst_23 {dimension_numbers = #tpu.dot_dimension_numbers<[1], [0], [0], [1], [0, 0, 1, 1], [], []>} : vector<8x128xf32>, vector<128x128xf32>, vector<8x128xf32> -> vector<8x128xf32>
    %39 = vector.broadcast %8 : vector<1x128xf32> to vector<8x128xf32>
    %40 = arith.addf %38, %39 : vector<8x128xf32>
    %cst_24 = arith.constant dense<0.000000e+00> : vector<128xf32>
    %41 = vector.multi_reduction <add>, %40, %cst_24 [0] : vector<8x128xf32> to vector<128xf32>
    %42 = vector.shape_cast %41 : vector<128xf32> to vector<1x128xf32>
    %cst_25 = arith.constant 8.000000e+00 : f32
    %43 = vector.broadcast %cst_25 : f32 to vector<1x128xf32>
    %44 = arith.divf %42, %43 : vector<1x128xf32>
    %45 = vector.broadcast %44 : vector<1x128xf32> to vector<8x128xf32>
    %46 = arith.subf %40, %45 : vector<8x128xf32>
    %47 = arith.mulf %46, %46 : vector<8x128xf32>
    %cst_26 = arith.constant dense<0.000000e+00> : vector<128xf32>
    %48 = vector.multi_reduction <add>, %47, %cst_26 [0] : vector<8x128xf32> to vector<128xf32>
    %49 = vector.shape_cast %48 : vector<128xf32> to vector<1x128xf32>
    %cst_27 = arith.constant 8.000000e+00 : f32
    %50 = vector.broadcast %cst_27 : f32 to vector<1x128xf32>
    %51 = arith.divf %49, %50 : vector<1x128xf32>
    %cst_28 = arith.constant 9.99999974E-6 : f32
    %52 = vector.broadcast %cst_28 : f32 to vector<1x128xf32>
    %53 = arith.addf %51, %52 : vector<1x128xf32>
    %54 = math.rsqrt %53 : vector<1x128xf32>
    %55 = vector.broadcast %54 : vector<1x128xf32> to vector<8x128xf32>
    %56 = arith.mulf %46, %55 : vector<8x128xf32>
    %57 = vector.broadcast %9 : vector<1x128xf32> to vector<8x128xf32>
    %58 = arith.mulf %56, %57 : vector<8x128xf32>
    %59 = vector.broadcast %10 : vector<1x128xf32> to vector<8x128xf32>
    %60 = arith.addf %58, %59 : vector<8x128xf32>
    %cst_29 = arith.constant 0.000000e+00 : f32
    %61 = vector.broadcast %cst_29 : f32 to vector<8x128xf32>
    %62 = arith.maximumf %60, %61 : vector<8x128xf32>
    %c0_30 = arith.constant 0 : index
    %c0_31 = arith.constant 0 : index
    %63 = vector.load %arg5[%c0_30, %c0_31] : memref<128x128xf32, #tpu.memory_space<vmem>>, vector<128x128xf32>
    %cst_32 = arith.constant dense<0.000000e+00> : vector<8x128xf32>
    %64 = tpu.matmul %62, %63, %cst_32 {dimension_numbers = #tpu.dot_dimension_numbers<[1], [0], [0], [1], [0, 0, 1, 1], [], []>} : vector<8x128xf32>, vector<128x128xf32>, vector<8x128xf32> -> vector<8x128xf32>
    %c0_33 = arith.constant 0 : index
    %c0_34 = arith.constant 0 : index
    %65 = vector.load %arg6[%c0_33, %c0_34] : memref<1x128xf32, #tpu.memory_space<vmem>>, vector<1x128xf32>
    %66 = vector.broadcast %65 : vector<1x128xf32> to vector<8x128xf32>
    %67 = arith.addf %64, %66 : vector<8x128xf32>
    %cst_35 = arith.constant 0.000000e+00 : f32
    %68 = vector.broadcast %cst_35 : f32 to vector<8x128xf32>
    %69 = arith.maximumf %67, %68 : vector<8x128xf32>
    %c0_36 = arith.constant 0 : index
    %c0_37 = arith.constant 0 : index
    %70 = vector.load %arg9[%c0_36, %c0_37] : memref<8x128xf32, #tpu.memory_space<vmem>>, vector<8x128xf32>
    tpu.vector_store %arg9[%c0_36, %c0_37], %69 {strides = array<i32>} : memref<8x128xf32, #tpu.memory_space<vmem>>, vector<8x128xf32>,
    return
  }
}

</mosaic_0001>

<llo_original>
// kernel: tpu_custom_call.1
$region0: #{tpu_custom_call.1}
  #allocation0 [shape = 'u32[]', space=smem, size = 0x4, offset = 0x4, fixed_abs, tag = 'smem constant byte address 0x4 - core index']
  #allocation1 [shape = 'u32[72,128]{1,0:T(1,128)}', space=vmem, size = 0x9000, scoped, tag = 'internal scratch']
  %s0 = inlined_call_operand.hbm [shape: f32[8,128], index: 0, kind: input, shape index: {}]
  %s1 = inlined_call_operand.hbm [shape: f32[128,128], index: 1, kind: input, shape index: {}]
  %s2 = inlined_call_operand.vmem [shape: f32[1,128], index: 2, kind: input, shape index: {}]
  %s3 = inlined_call_operand.hbm [shape: f32[128,128], index: 3, kind: input, shape index: {}]
  %s4 = inlined_call_operand.vmem [shape: f32[1,128], index: 4, kind: input, shape index: {}]
  %s5 = inlined_call_operand.hbm [shape: f32[128,128], index: 5, kind: input, shape index: {}]
  %s6 = inlined_call_operand.vmem [shape: f32[1,128], index: 6, kind: input, shape index: {}]
  %s7 = inlined_call_operand.vmem [shape: f32[1,128], index: 7, kind: input, shape index: {}]
  %s8 = inlined_call_operand.vmem [shape: f32[1,128], index: 8, kind: input, shape index: {}]
  %s9 = inlined_call_operand.hbm [shape: f32[8,128], index: 9, kind: output, shape index: {}]
  %s10 = sld [smem:[#allocation0]]
  $region62: #{tpu_custom_call.1} parent=0
    _
  %s12 = ssub.s32 1, %s10
  %s13 = scalar_select 0, %s12, %s10
  $region1: #{tpu_custom_call.1} parent=0
    #allocation2 [shape = 'u8[4096]{0}', space=vmem, size = 0x1000, scoped, tag = 'input window, operand 0, single buffered']
    #allocation3 [shape = 's32[1]{0}', space=sflag, size = 0x4, scoped, tag = 'scoped memory for tpu_custom_call.1']
    #allocation4 [shape = 's32[1]{0}', space=sflag, size = 0x4, scoped, tag = 'scoped memory for tpu_custom_call.1']
    #allocation5 [shape = 'u8[65536]{0}', space=vmem, size = 0x10000, scoped, tag = 'input window, operand 1, single buffered']
    #allocation6 [shape = 's32[1]{0}', space=sflag, size = 0x4, scoped, tag = 'scoped memory for tpu_custom_call.1']
    #allocation7 [shape = 'u8[65536]{0}', space=vmem, size = 0x10000, scoped, tag = 'input window, operand 3, single buffered']
    #allocation8 [shape = 'u8[65536]{0}', space=vmem, size = 0x10000, scoped, tag = 'input window, operand 5, single buffered']
    #allocation9 [shape = 's32[1]{0}', space=sflag, size = 0x4, scoped, tag = 'scoped memory for tpu_custom_call.1']
    #allocation10 [shape = 'u8[4096]{0}', space=vmem, size = 0x1000, scoped, tag = 'output window, operand 0, single buffered']
    %14 = vsyncpa [#allocation3], 0
    %15 = vsyncpa [#allocation6], 0
    %16 = vsyncpa [#allocation9], 0
    %17 = vsyncpa [#allocation4], 0
    // Predicated region
    $region2: #{tpu_custom_call.1} parent=1 // pred_check
      _
    $region3: #{tpu_custom_call.1} parent=1 // pred_check_branch
      %19 = sbr.rel (0) target = $region5
    $region4: #{tpu_custom_call.1} parent=1 // pred_region
      %21 = vsyncadd [#allocation3], 0
      %s23 = sshll.u32 %s0, 4
      %s24 = int_to_ptr.hbm [resolvable:$true] %s23
      %s25 = sshll.u32 [#allocation2], 4
      %s26 = int_to_ptr.vmem [resolvable:$true] %s25
      %28 = dma.hbm_to_vmem [thread:$0]  %s24, 128, %s26, [#allocation3]
    $region5: #{tpu_custom_call.1} parent=1 // pred_fallthru
      _
    // Predicated region
    $region6: #{tpu_custom_call.1} parent=1 // pred_check
      _
    $region7: #{tpu_custom_call.1} parent=1 // pred_check_branch
      %30 = sbr.rel (0) target = $region9
    $region8: #{tpu_custom_call.1} parent=1 // pred_region
      %32 = vsyncadd [#allocation6], 0
      %s33 = sshll.u32 %s1, 4
      %s34 = int_to_ptr.hbm [resolvable:$true] %s33
      %s35 = sshll.u32 [#allocation5], 4
      %s36 = int_to_ptr.vmem [resolvable:$true] %s35
      %41 = dma.hbm_to_vmem [thread:$0]  %s34, 2048, %s36, [#allocation6], 128, 128, 8
    $region9: #{tpu_custom_call.1} parent=1 // pred_fallthru
      _
    // Predicated region
    $region10: #{tpu_custom_call.1} parent=1 // pred_check
      _
    $region11: #{tpu_custom_call.1} parent=1 // pred_check_branch
      %43 = sbr.rel (0) target = $region13
    $region12: #{tpu_custom_call.1} parent=1 // pred_region
      _
    $region13: #{tpu_custom_call.1} parent=1 // pred_fallthru
      _
    // Predicated region
    $region14: #{tpu_custom_call.1} parent=1 // pred_check
      _
    $region15: #{tpu_custom_call.1} parent=1 // pred_check_branch
      %45 = sbr.rel (0) target = $region17
    $region16: #{tpu_custom_call.1} parent=1 // pred_region
      %47 = vsyncadd [#allocation6], 0
      %s48 = sshll.u32 %s3, 4
      %s49 = int_to_ptr.hbm [resolvable:$true] %s48
      %s50 = sshll.u32 [#allocation7], 4
      %s51 = int_to_ptr.vmem [resolvable:$true] %s50
      %56 = dma.hbm_to_vmem [thread:$0]  %s49, 2048, %s51, [#allocation6], 128, 128, 8
    $region17: #{tpu_custom_call.1} parent=1 // pred_fallthru
      _
    // Predicated region
    $region18: #{tpu_custom_call.1} parent=1 // pred_check
      _
    $region19: #{tpu_custom_call.1} parent=1 // pred_check_branch
      %58 = sbr.rel (0) target = $region21
    $region20: #{tpu_custom_call.1} parent=1 // pred_region
      _
    $region21: #{tpu_custom_call.1} parent=1 // pred_fallthru
      _
    // Predicated region
    $region22: #{tpu_custom_call.1} parent=1 // pred_check
      _
    $region23: #{tpu_custom_call.1} parent=1 // pred_check_branch
      %60 = sbr.rel (0) target = $region25
    $region24: #{tpu_custom_call.1} parent=1 // pred_region
      %62 = vsyncadd [#allocation9], 0
      %s63 = sshll.u32 %s5, 4
      %s64 = int_to_ptr.hbm [resolvable:$true] %s63
      %s65 = sshll.u32 [#allocation8], 4
      %s66 = int_to_ptr.vmem [resolvable:$true] %s65
      %71 = dma.hbm_to_vmem [thread:$0]  %s64, 2048, %s66, [#allocation9], 128, 128, 8
    $region25: #{tpu_custom_call.1} parent=1 // pred_fallthru
      _
    // Predicated region
    $region26: #{tpu_custom_call.1} parent=1 // pred_check
      _
    $region27: #{tpu_custom_call.1} parent=1 // pred_check_branch
      %73 = sbr.rel (0) target = $region29
    $region28: #{tpu_custom_call.1} parent=1 // pred_region
      _
    $region29: #{tpu_custom_call.1} parent=1 // pred_fallthru
      _
    // Predicated region
    $region30: #{tpu_custom_call.1} parent=1 // pred_check
      _
    $region31: #{tpu_custom_call.1} parent=1 // pred_check_branch
      %75 = sbr.rel (0) target = $region33
    $region32: #{tpu_custom_call.1} parent=1 // pred_region
      _
    $region33: #{tpu_custom_call.1} parent=1 // pred_fallthru
      _
    // Predicated region
    $region34: #{tpu_custom_call.1} parent=1 // pred_check
      _
    $region35: #{tpu_custom_call.1} parent=1 // pred_check_branch
      %77 = sbr.rel (0) target = $region37
    $region36: #{tpu_custom_call.1} parent=1 // pred_region
      _
    $region37: #{tpu_custom_call.1} parent=1 // pred_fallthru
      _
    // Predicated region
    $region38: #{tpu_custom_call.1} parent=1 // pred_check
      _
    $region39: #{tpu_custom_call.1} parent=1 // pred_check_branch
      %79 = sbr.rel (0) target = $region41
    $region40: #{tpu_custom_call.1} parent=1 // pred_region
      %81 = dma.done [#allocation3], 128
    $region41: #{tpu_custom_call.1} parent=1 // pred_fallthru
      _
    // Predicated region
    $region42: #{tpu_custom_call.1} parent=1 // pred_check
      _
    $region43: #{tpu_custom_call.1} parent=1 // pred_check_branch
      %83 = sbr.rel (0) target = $region45
    $region44: #{tpu_custom_call.1} parent=1 // pred_region
      %85 = dma.done [#allocation6], 2048
    $region45: #{tpu_custom_call.1} parent=1 // pred_fallthru
      _
    // Predicated region
    $region46: #{tpu_custom_call.1} parent=1 // pred_check
      _
    $region47: #{tpu_custom_call.1} parent=1 // pred_check_branch
      %87 = sbr.rel (0) target = $region49
    $region48: #{tpu_custom_call.1} parent=1 // pred_region
      %89 = dma.done [#allocation6], 2048
    $region49: #{tpu_custom_call.1} parent=1 // pred_fallthru
      _
    // Predicated region
    $region50: #{tpu_custom_call.1} parent=1 // pred_check
      _
    $region51: #{tpu_custom_call.1} parent=1 // pred_check_branch
      %91 = sbr.rel (0) target = $region53
    $region52: #{tpu_custom_call.1} parent=1 // pred_region
      %93 = dma.done [#allocation9], 2048
    $region53: #{tpu_custom_call.1} parent=1 // pred_fallthru
      _
    %v94 = vld [vmem:[#allocation2] sm:$0xff]
    %v95 = vld [vmem:[#allocation5] sm:$0xff]
    %v96 = vld [vmem:[#allocation5 + $0x8] sm:$0xff]
    %v97 = vld [vmem:[#allocation5 + $0x10] sm:$0xff]
    %v98 = vld [vmem:[#allocation5 + $0x18] sm:$0xff]
    %v99 = vld [vmem:[#allocation5 + $0x20] sm:$0xff]
    %v100 = vld [vmem:[#allocation5 + $0x28] sm:$0xff]
    %v101 = vld [vmem:[#allocation5 + $0x30] sm:$0xff]
    %v102 = vld [vmem:[#allocation5 + $0x38] sm:$0xff]
    %v103 = vld [vmem:[#allocation5 + $0x40] sm:$0xff]
    %v104 = vld [vmem:[#allocation5 + $0x48] sm:$0xff]
    %v105 = vld [vmem:[#allocation5 + $0x50] sm:$0xff]
    %v106 = vld [vmem:[#allocation5 + $0x58] sm:$0xff]
    %v107 = vld [vmem:[#allocation5 + $0x60] sm:$0xff]
    %v108 = vld [vmem:[#allocation5 + $0x68] sm:$0xff]
    %v109 = vld [vmem:[#allocation5 + $0x70] sm:$0xff]
    %v110 = vld [vmem:[#allocation5 + $0x78] sm:$0xff]
    %v111 = vld [vmem:[%s2] sm:$0x1]
    %v113 = vperm.slane %v111, 0
    %115 = vmatpush.msra.mxu0 %v110
    %116 = vmatpush.msra.mxu0 %v109
    %117 = vmatpush.msra.mxu0 %v108
    %118 = vmatpush.msra.mxu0 %v107
    %119 = vmatpush.msra.mxu0 %v106
    %120 = vmatpush.msra.mxu0 %v105
    %121 = vmatpush.msra.mxu0 %v104
    %122 = vmatpush.msra.mxu0 %v103
    %123 = vmatpush.msra.mxu0 %v102
    %124 = vmatpush.msra.mxu0 %v101
    %125 = vmatpush.msra.mxu0 %v100
    %126 = vmatpush.msra.mxu0 %v99
    %127 = vmatpush.msra.mxu0 %v98
    %128 = vmatpush.msra.mxu0 %v97
    %129 = vmatpush.msra.mxu0 %v96
    %130 = vmatpush.msra.mxu0 %v95
    %131 = vmatmul.f32.gmra.mxu0 %v94
    %v132 = vpop.f32.mrf.mxu0
    %v133 = vadd.f32 %v113, %v132
    %134 = vdwg.mxu0
    %v135 = vmax.f32 %v133, 0.0
    %v136 = vld [vmem:[%s4] sm:$0x1]
    %v137 = vld [vmem:[%s7] sm:$0x1]
    %v138 = vld [vmem:[%s8] sm:$0x1]
    %v139 = vld [vmem:[#allocation7] sm:$0xff]
    %v140 = vld [vmem:[#allocation7 + $0x8] sm:$0xff]
    %v141 = vld [vmem:[#allocation7 + $0x10] sm:$0xff]
    %v142 = vld [vmem:[#allocation7 + $0x18] sm:$0xff]
    %v143 = vld [vmem:[#allocation7 + $0x20] sm:$0xff]
    %v144 = vld [vmem:[#allocation7 + $0x28] sm:$0xff]
    %v145 = vld [vmem:[#allocation7 + $0x30] sm:$0xff]
    %v146 = vld [vmem:[#allocation7 + $0x38] sm:$0xff]
    %v147 = vld [vmem:[#allocation7 + $0x40] sm:$0xff]
    %v148 = vld [vmem:[#allocation7 + $0x48] sm:$0xff]
    %v149 = vld [vmem:[#allocation7 + $0x50] sm:$0xff]
    %v150 = vld [vmem:[#allocation7 + $0x58] sm:$0xff]
    %v151 = vld [vmem:[#allocation7 + $0x60] sm:$0xff]
    %v152 = vld [vmem:[#allocation7 + $0x68] sm:$0xff]
    %v153 = vld [vmem:[#allocation7 + $0x70] sm:$0xff]
    %v154 = vld [vmem:[#allocation7 + $0x78] sm:$0xff]
    %v156 = vperm.slane %v136, 0
    %158 = vmatpush.msra.mxu0 %v154
    %159 = vmatpush.msra.mxu0 %v153
    %160 = vmatpush.msra.mxu0 %v152
    %161 = vmatpush.msra.mxu0 %v151
    %162 = vmatpush.msra.mxu0 %v150
    %163 = vmatpush.msra.mxu0 %v149
    %164 = vmatpush.msra.mxu0 %v148
    %165 = vmatpush.msra.mxu0 %v147
    %166 = vmatpush.msra.mxu0 %v146
    %167 = vmatpush.msra.mxu0 %v145
    %168 = vmatpush.msra.mxu0 %v144
    %169 = vmatpush.msra.mxu0 %v143
    %170 = vmatpush.msra.mxu0 %v142
    %171 = vmatpush.msra.mxu0 %v141
    %172 = vmatpush.msra.mxu0 %v140
    %173 = vmatpush.msra.mxu0 %v139
    %174 = vmatmul.f32.gmra.mxu0 %v135
    %v175 = vpop.f32.mrf.mxu0
    %v176 = vadd.f32 %v156, %v175
    %177 = vdwg.mxu0
    %v178 = vrot.slane %v176, 4
    %v179 = vadd.f32 %v176, %v178
    %v180 = vrot.slane %v179, 2
    %v181 = vadd.f32 %v179, %v180
    %v182 = vrot.slane %v181, 1
    %v183 = vadd.f32 %v181, %v182
    %v184 = vrcp.pop 8.0
    %v185 = vmul.f32 8.0, %v184
    %v186 = vsub.f32 1.0, %v185
    %v187 = vmul.f32 %v184, %v186
    %v188 = vadd.f32 %v184, %v187
    %vm189 = vweird.f32 %v184
    %v190 = vsel %vm189, %v184, %v188
    %v191 = vmul.f32 %v183, %v190
    %v192 = vsub.f32 %v176, %v191
    %v193 = vmul.f32 %v192, %v192
    %v194 = vrot.slane %v193, 4
    %v195 = vadd.f32 %v193, %v194
    %v196 = vrot.slane %v195, 2
    %v197 = vadd.f32 %v195, %v196
    %v198 = vrot.slane %v197, 1
    %v199 = vadd.f32 %v197, %v198
    %v200 = vmul.f32 %v199, %v190
    %v201 = vadd.f32 %v200, 1e-05
    %v202 = vrsqrt.pop %v201
    %v203 = vmul.f32 %v202, %v201
    %v204 = vmul.f32 %v203, %v202
    %v205 = vmul.f32 0.5, %v204
    %v206 = vsub.f32 1.5, %v205
    %v207 = vmul.f32 %v202, %v206
    %vm208 = vweird.f32 %v201
    %vm209 = vweird.f32 %v202
    %vm210 = vmor %vm208, %vm209
    %v211 = vsel %vm210, %v202, %v207
    %v212 = vmul.f32 %v192, %v211
    %v214 = vperm.slane %v137, 0
    %v216 = vmul.f32 %v212, %v214
    %v218 = vperm.slane %v138, 0
    %v220 = vadd.f32 %v216, %v218
    %v221 = vmax.f32 %v220, 0.0
    %222 = vmatpush.msra.mxu0 %v154
    %223 = vmatpush.msra.mxu0 %v153
    %224 = vmatpush.msra.mxu0 %v152
    %225 = vmatpush.msra.mxu0 %v151
    %226 = vmatpush.msra.mxu0 %v150
    %227 = vmatpush.msra.mxu0 %v149
    %228 = vmatpush.msra.mxu0 %v148
    %229 = vmatpush.msra.mxu0 %v147
    %230 = vmatpush.msra.mxu0 %v146
    %231 = vmatpush.msra.mxu0 %v145
    %232 = vmatpush.msra.mxu0 %v144
    %233 = vmatpush.msra.mxu0 %v143
    %234 = vmatpush.msra.mxu0 %v142
    %235 = vmatpush.msra.mxu0 %v141
    %236 = vmatpush.msra.mxu0 %v140
    %237 = vmatpush.msra.mxu0 %v139
    %238 = vmatmul.f32.gmra.mxu0 %v221
    %v239 = vpop.f32.mrf.mxu0
    %v240 = vadd.f32 %v156, %v239
    %241 = vdwg.mxu0
    %v242 = vrot.slane %v240, 4
    %v243 = vadd.f32 %v240, %v242
    %v244 = vrot.slane %v243, 2
    %v245 = vadd.f32 %v243, %v244
    %v246 = vrot.slane %v245, 1
    %v247 = vadd.f32 %v245, %v246
    %v248 = vmul.f32 %v247, %v190
    %v249 = vsub.f32 %v240, %v248
    %v250 = vmul.f32 %v249, %v249
    %v251 = vrot.slane %v250, 4
    %v252 = vadd.f32 %v250, %v251
    %v253 = vrot.slane %v252, 2
    %v254 = vadd.f32 %v252, %v253
    %v255 = vrot.slane %v254, 1
    %v256 = vadd.f32 %v254, %v255
    %v257 = vmul.f32 %v256, %v190
    %v258 = vadd.f32 %v257, 1e-05
    %v259 = vrsqrt.pop %v258
    %v260 = vmul.f32 %v259, %v258
    %v261 = vmul.f32 %v260, %v259
    %v262 = vmul.f32 0.5, %v261
    %v263 = vsub.f32 1.5, %v262
    %v264 = vmul.f32 %v259, %v263
    %vm265 = vweird.f32 %v258
    %vm266 = vweird.f32 %v259
    %vm267 = vmor %vm265, %vm266
    %v268 = vsel %vm267, %v259, %v264
    %v269 = vmul.f32 %v249, %v268
    %v270 = vmul.f32 %v269, %v214
    %v271 = vadd.f32 %v270, %v218
    %v272 = vmax.f32 %v271, 0.0
    %v273 = vld [vmem:[#allocation8] sm:$0xff]
    %v274 = vld [vmem:[#allocation8 + $0x8] sm:$0xff]
    %v275 = vld [vmem:[#allocation8 + $0x10] sm:$0xff]
    %v276 = vld [vmem:[#allocation8 + $0x18] sm:$0xff]
    %v277 = vld [vmem:[#allocation8 + $0x20] sm:$0xff]
    %v278 = vld [vmem:[#allocation8 + $0x28] sm:$0xff]
    %v279 = vld [vmem:[#allocation8 + $0x30] sm:$0xff]
    %v280 = vld [vmem:[#allocation8 + $0x38] sm:$0xff]
    %v281 = vld [vmem:[#allocation8 + $0x40] sm:$0xff]
    %v282 = vld [vmem:[#allocation8 + $0x48] sm:$0xff]
    %v283 = vld [vmem:[#allocation8 + $0x50] sm:$0xff]
    %v284 = vld [vmem:[#allocation8 + $0x58] sm:$0xff]
    %v285 = vld [vmem:[#allocation8 + $0x60] sm:$0xff]
    %v286 = vld [vmem:[#allocation8 + $0x68] sm:$0xff]
    %v287 = vld [vmem:[#allocation8 + $0x70] sm:$0xff]
    %v288 = vld [vmem:[#allocation8 + $0x78] sm:$0xff]
    %v289 = vld [vmem:[%s6] sm:$0x1]
    %v291 = vperm.slane %v289, 0
    %293 = vmatpush.msra.mxu0 %v288
    %294 = vmatpush.msra.mxu0 %v287
    %295 = vmatpush.msra.mxu0 %v286
    %296 = vmatpush.msra.mxu0 %v285
    %297 = vmatpush.msra.mxu0 %v284
    %298 = vmatpush.msra.mxu0 %v283
    %299 = vmatpush.msra.mxu0 %v282
    %300 = vmatpush.msra.mxu0 %v281
    %301 = vmatpush.msra.mxu0 %v280
    %302 = vmatpush.msra.mxu0 %v279
    %303 = vmatpush.msra.mxu0 %v278
    %304 = vmatpush.msra.mxu0 %v277
    %305 = vmatpush.msra.mxu0 %v276
    %306 = vmatpush.msra.mxu0 %v275
    %307 = vmatpush.msra.mxu0 %v274
    %308 = vmatpush.msra.mxu0 %v273
    %309 = vmatmul.f32.gmra.mxu0 %v272
    %v310 = vpop.f32.mrf.mxu0
    %v311 = vadd.f32 %v291, %v310
    %312 = vdwg.mxu0
    %v313 = vmax.f32 %v311, 0.0
    %314 = vst [vmem:[#allocation10] sm:$0xff] %v313
    // Predicated region
    $region54: #{tpu_custom_call.1} parent=1 // pred_check
      _
    $region55: #{tpu_custom_call.1} parent=1 // pred_check_branch
      %316 = sbr.rel (0) target = $region57
    $region56: #{tpu_custom_call.1} parent=1 // pred_region
      %318 = vsyncadd [#allocation4], 0
      %s320 = sshll.u32 [#allocation10], 4
      %s321 = int_to_ptr.vmem [resolvable:$true] %s320
      %s322 = sshll.u32 %s9, 4
      %s323 = int_to_ptr.hbm [resolvable:$true] %s322
      %325 = dma.vmem_to_hbm [thread:$0]  %s321, 128, %s323, [#allocation4]
    $region57: #{tpu_custom_call.1} parent=1 // pred_fallthru
      _
    // Predicated region
    $region58: #{tpu_custom_call.1} parent=1 // pred_check
      _
    $region59: #{tpu_custom_call.1} parent=1 // pred_check_branch
      %327 = sbr.rel (0) target = $region61
    $region60: #{tpu_custom_call.1} parent=1 // pred_region
      %329 = dma.done [#allocation4], 128
    $region61: #{tpu_custom_call.1} parent=1 // pred_fallthru
      _
    %330 = vsyncpa [#allocation3], 1
    %331 = vsyncpa [#allocation6], 1
    %332 = vsyncpa [#allocation9], 1
    %333 = vsyncpa [#allocation4], 1

</llo_original>
